<compile_context>
chip_gen: v7x
topology: tpu7x:2x2x1
jax: 0.10.0
libtpu: 0.0.40
codegen_flags: <defaults>
</compile_context>

<pallas_src>
import jax
import jax.numpy as jnp
from jax.experimental import pallas as pl
from jax.experimental.pallas import tpu as pltpu


def _cdiv(a, b):
    return (a + b - 1) // b


def _round8(n):
    return max(8, ((n + 7) // 8) * 8)


# ----------------------------------------------------------------------------
# Pallas kernel: fused gate MLP + concatenated (lane-padded) output heads
# ----------------------------------------------------------------------------
def gating_kernel(x_ref, w1_ref, w2_ref, wo_ref, bias_ref, out_ref):
    H1 = w1_ref.shape[1]          # 256
    H2 = w2_ref.shape[1]          # 256
    OP = wo_ref.shape[1]          # 128 (padded, lane-dense output width)

    # packed biases (f32): [b1 | b2 | bo_pad] at 128-aligned offsets
    b1 = bias_ref[:, 0:H1]
    b2 = bias_ref[:, H1:H1 + H2]
    bo = bias_ref[:, H1 + H2:H1 + H2 + OP]

    # gate: Linear(128->256) + ReLU. x arrives already in bf16 (wrapper cast);
    # MXU accumulates in f32, bias add / ReLU stay on the f32 VPU path.
    h = jnp.dot(x_ref[...], w1_ref[...], preferred_element_type=jnp.float32)
    h = jnp.maximum(h + b1, 0.0)
    # gate: Linear(256->256) + ReLU
    h = jnp.dot(h.astype(jnp.bfloat16), w2_ref[...],
                preferred_element_type=jnp.float32)
    h = jnp.maximum(h + b2, 0.0)
    # all output heads fused into one lane-dense 256x128 matmul
    o = jnp.dot(h.astype(jnp.bfloat16), wo_ref[...],
                preferred_element_type=jnp.float32)
    out_ref[...] = (o + bo).astype(out_ref.dtype)     # bf16 store, 128 lanes


# ----------------------------------------------------------------------------
# Tiling: balanced 8-aligned batch tiles, >=2 grid steps for megacore (v7x)
# ----------------------------------------------------------------------------
_TB_MAX = 2048      # per-tile row cap (footprint at 2048 rows: a few MiB)
_MIN_TILES = 2      # so dimension_semantics=("parallel",) can shard 2 TCs


def _choose_tiling(B):
    row_groups = max(1, _cdiv(B, 8))                       # can't split below 8 rows
    n_tiles = min(max(_MIN_TILES, _cdiv(B, _TB_MAX)), row_groups)
    tb = _round8(_cdiv(B, n_tiles))                        # balanced tile size
    Bp = n_tiles * tb                                      # <8 pad rows per tile
    return tb, Bp, n_tiles


def fused_gating_call(x, w1, w2, wo, bias, *, out_dtype=jnp.bfloat16):
    B, F = x.shape
    OP = wo.shape[1]                                       # padded output width
    tb, Bp, n_tiles = _choose_tiling(B)

    x = x.astype(jnp.bfloat16)                             # cast ONCE (input stream)
    if Bp != B:
        x = jnp.pad(x, ((0, Bp - B), (0, 0)))

    resident = lambda shape: pl.BlockSpec(shape, lambda i: (0, 0))
    out = pl.pallas_call(
        gating_kernel,
        out_shape=jax.ShapeDtypeStruct((Bp, OP), out_dtype),
        grid_spec=pl.GridSpec(
            grid=(n_tiles,),
            in_specs=[
                pl.BlockSpec((tb, F), lambda i: (i, 0)),   # x: tiled over batch
                resident(w1.shape),                        # weights stay in VMEM
                resident(w2.shape),
                resident(wo.shape),
                resident(bias.shape),
            ],
            out_specs=pl.BlockSpec((tb, OP), lambda i: (i, 0)),
        ),
        compiler_params=pltpu.CompilerParams(
            dimension_semantics=("parallel",),
            vmem_limit_bytes=32 * 1024 * 1024),
    )(x, w1, w2, wo, bias)
    # Return the padded slab; callers slice per-head directly (no extra copy).
    return out


# ----------------------------------------------------------------------------
# Deterministic parameter construction (mirrors DenseGatingFunction.__init__)
# ----------------------------------------------------------------------------
def xavier_uniform(key, fan_in, fan_out):
    # torch.nn.init.xavier_uniform on a (out, in) weight; we store it as (in, out).
    limit = jnp.sqrt(6.0 / (fan_in + fan_out))
    return jax.random.uniform(key, (fan_in, fan_out), jnp.float32, -limit, limit)


def build_params(key, gate_layers, flattened_shapes, weight_dtype=jnp.bfloat16):
    keys = jax.random.split(key, 2 + len(flattened_shapes))
    total = sum(flattened_shapes)
    o_pad = ((total + 127) // 128) * 128          # lane-dense fused output width

    # gate linear 1: 128 -> 256
    w1 = xavier_uniform(keys[0], gate_layers[0], gate_layers[1])
    b1 = jnp.full((1, gate_layers[1]), 0.01, jnp.float32)
    # gate linear 2: 256 -> 256
    w2 = xavier_uniform(keys[1], gate_layers[1], gate_layers[2])
    b2 = jnp.full((1, gate_layers[2]), 0.01, jnp.float32)
    # output heads: Linear(256 -> o_i), each xavier-init'd separately, concat + pad
    head_ws = [xavier_uniform(keys[2 + i], gate_layers[-1], o)
               for i, o in enumerate(flattened_shapes)]
    wo = jnp.concatenate(head_ws, axis=1)
    wo = jnp.pad(wo, ((0, 0), (0, o_pad - total)))          # zero-padded lanes
    bo = jnp.concatenate(
        [jnp.full((1, total), 0.01, jnp.float32),
         jnp.zeros((1, o_pad - total), jnp.float32)], axis=1)

    # Weights as bf16 MXU inputs by default; pass weight_dtype=jnp.float32 for
    # exact f32 parity (resident weights -> negligible perf cost).
    w1 = w1.astype(weight_dtype)
    w2 = w2.astype(weight_dtype)
    wo = wo.astype(weight_dtype)
    bias = jnp.concatenate([b1, b2, bo], axis=1)             # (1, 256+256+128) f32
    return w1, w2, wo, bias, total


# ----------------------------------------------------------------------------
# Forward wrapper: kernel + per-head split/reshape (metadata-level slices only)
# ----------------------------------------------------------------------------
def dense_gating_forward(x, params, output_shapes, flattened_shapes):
    w1, w2, wo, bias, total = params
    B = x.shape[0]
    out = fused_gating_call(x, w1, w2, wo, bias)              # (Bp, 128) bf16 slab
    results = []
    off = 0
    for flat, shape in zip(flattened_shapes, output_shapes):
        # fold batch trim + column trim into the per-head slice; cast back to f32
        chunk = out[:B, off:off + flat].astype(jnp.float32)
        results.append(chunk.reshape(-1, *shape))
        off += flat
    return results


# ----------------------------------------------------------------------------
# Plain-JAX reference (same dtype path as the kernel) for validation
# ----------------------------------------------------------------------------
def jax_reference(x, params):
    w1, w2, wo, bias, total = params
    H1, H2 = w1.shape[1], w2.shape[1]
    b1 = bias[:, :H1]
    b2 = bias[:, H1:H1 + H2]
    bo = bias[:, H1 + H2:]
    h = jnp.maximum(jnp.dot(x.astype(jnp.bfloat16), w1,
                            preferred_element_type=jnp.float32) + b1, 0.0)
    h = jnp.maximum(jnp.dot(h.astype(jnp.bfloat16), w2,
                            preferred_element_type=jnp.float32) + b2, 0.0)
    o = jnp.dot(h.astype(jnp.bfloat16), wo,
                preferred_element_type=jnp.float32) + bo
    return o.astype(jnp.bfloat16)[:, :total].astype(jnp.float32)


if __name__ == "__main__":
    # Synthetic stand-in for the SDD circuit `beta`:
    #   num_branches = {2: 5 decomposition nodes, 3: 4 decomposition nodes}
    #   len(beta.elements) = 6, num_reps = 1
    num_reps = 1
    num_branches = {2: 5, 3: 4}
    num_elements = 6
    gate_layers = [128, 256, 256]

    output_shapes = [(v, k, num_reps) for k, v in num_branches.items()] \
                    + [(num_reps,)] + [(num_elements, num_reps)]
    flattened_shapes = [v * k * num_reps for k, v in num_branches.items()] \
                       + [num_reps] + [num_elements * num_reps]

    key = jax.random.PRNGKey(0)
    kx, kp = jax.random.split(key)
    params = build_params(kp, gate_layers, flattened_shapes)

    # batch=8 (single tile) and batch=40 (2 balanced tiles + pad rows)
    for batch in (8, 40):
        x = jax.random.normal(jax.random.fold_in(kx, batch),
                              (batch, gate_layers[0]), jnp.float32)
        outs = dense_gating_forward(x, params, output_shapes, flattened_shapes)
        outs = jax.block_until_ready(outs)

        # sanity: shapes match PyTorch `o(x).reshape(-1, *s)` semantics
        expected = [(batch,) + s for s in output_shapes]
        assert [o.shape for o in outs] == expected, \
            ([o.shape for o in outs], expected)

        # numerical check against a plain-JAX reference on the same dtype path
        ref = jax_reference(x, params)
        got = jnp.concatenate([o.reshape(batch, -1) for o in outs], axis=1)
        assert jnp.allclose(got, ref, atol=3e-2, rtol=3e-2), \
            float(jnp.max(jnp.abs(got - ref)))

    # TODO(synk): gate_dropout (training-time torch.nn.Dropout) is not used in
    # the default config and is omitted.
    print("KERNEL_OK")
</pallas_src>

<mosaic_0001>
module attributes {stable_mosaic.version = 11 : i64} {
  func.func @gating_kernel(%arg0: i32, %arg1: memref<8x128xbf16, #tpu.memory_space<vmem>>, %arg2: memref<128x256xbf16, #tpu.memory_space<vmem>>, %arg3: memref<256x256xbf16, #tpu.memory_space<vmem>>, %arg4: memref<256x128xbf16, #tpu.memory_space<vmem>>, %arg5: memref<1x640xf32, #tpu.memory_space<vmem>>, %arg6: memref<8x128xbf16, #tpu.memory_space<vmem>>) attributes {dimension_semantics = [#tpu.dimension_semantics<parallel>], iteration_bounds = array<i64: 1>, scalar_prefetch = 0 : i64, scratch_operands = 0 : i64, tpu.core_type = #tpu.core_type<tc>, window_params = [{transform_indices = @transform_0, window_bounds = array<i64: 8, 128>}, {pipeline_mode = #tpu.pipeline_mode<synchronous>, transform_indices = @transform_1, window_bounds = array<i64: 128, 256>}, {pipeline_mode = #tpu.pipeline_mode<synchronous>, transform_indices = @transform_2, window_bounds = array<i64: 256, 256>}, {pipeline_mode = #tpu.pipeline_mode<synchronous>, transform_indices = @transform_3, window_bounds = array<i64: 256, 128>}, {pipeline_mode = #tpu.pipeline_mode<synchronous>, transform_indices = @transform_4, window_bounds = array<i64: 1, 640>}, {transform_indices = @transform_5, window_bounds = array<i64: 8, 128>}]} {
    %c0 = arith.constant 0 : index
    %c0_0 = arith.constant 0 : index
    %0 = vector.load %arg5[%c0, %c0_0] : memref<1x640xf32, #tpu.memory_space<vmem>>, vector<1x256xf32>
    %c0_1 = arith.constant 0 : index
    %c256 = arith.constant 256 : index
    %1 = vector.load %arg5[%c0_1, %c256] : memref<1x640xf32, #tpu.memory_space<vmem>>, vector<1x256xf32>
    %c0_2 = arith.constant 0 : index
    %c512 = arith.constant 512 : index
    %2 = vector.load %arg5[%c0_2, %c512] : memref<1x640xf32, #tpu.memory_space<vmem>>, vector<1x128xf32>
    %c0_3 = arith.constant 0 : index
    %c0_4 = arith.constant 0 : index
    %3 = vector.load %arg1[%c0_3, %c0_4] : memref<8x128xbf16, #tpu.memory_space<vmem>>, vector<8x128xbf16>
    %c0_5 = arith.constant 0 : index
    %c0_6 = arith.constant 0 : index
    %4 = vector.load %arg2[%c0_5, %c0_6] : memref<128x256xbf16, #tpu.memory_space<vmem>>, vector<128x256xbf16>
    %cst = arith.constant dense<0.000000e+00> : vector<8x256xf32>
    %5 = tpu.matmul %3, %4, %cst {dimension_numbers = #tpu.dot_dimension_numbers<[1], [0], [0], [1], [0, 0, 1, 1], [], []>} : vector<8x128xbf16>, vector<128x256xbf16>, vector<8x256xf32> -> vector<8x256xf32>
    %6 = vector.broadcast %0 : vector<1x256xf32> to vector<8x256xf32>
    %7 = arith.addf %5, %6 : vector<8x256xf32>
    %cst_7 = arith.constant 0.000000e+00 : f32
    %8 = vector.broadcast %cst_7 : f32 to vector<8x256xf32>
    %9 = arith.maximumf %7, %8 : vector<8x256xf32>
    %10 = arith.truncf %9 : vector<8x256xf32> to vector<8x256xbf16>
    %c0_8 = arith.constant 0 : index
    %c0_9 = arith.constant 0 : index
    %11 = vector.load %arg3[%c0_8, %c0_9] : memref<256x256xbf16, #tpu.memory_space<vmem>>, vector<256x256xbf16>
    %cst_10 = arith.constant dense<0.000000e+00> : vector<8x256xf32>
    %12 = tpu.matmul %10, %11, %cst_10 {dimension_numbers = #tpu.dot_dimension_numbers<[1], [0], [0], [1], [0, 0, 1, 1], [], []>} : vector<8x256xbf16>, vector<256x256xbf16>, vector<8x256xf32> -> vector<8x256xf32>
    %13 = vector.broadcast %1 : vector<1x256xf32> to vector<8x256xf32>
    %14 = arith.addf %12, %13 : vector<8x256xf32>
    %cst_11 = arith.constant 0.000000e+00 : f32
    %15 = vector.broadcast %cst_11 : f32 to vector<8x256xf32>
    %16 = arith.maximumf %14, %15 : vector<8x256xf32>
    %17 = arith.truncf %16 : vector<8x256xf32> to vector<8x256xbf16>
    %c0_12 = arith.constant 0 : index
    %c0_13 = arith.constant 0 : index
    %18 = vector.load %arg4[%c0_12, %c0_13] : memref<256x128xbf16, #tpu.memory_space<vmem>>, vector<256x128xbf16>
    %cst_14 = arith.constant dense<0.000000e+00> : vector<8x128xf32>
    %19 = tpu.matmul %17, %18, %cst_14 {dimension_numbers = #tpu.dot_dimension_numbers<[1], [0], [0], [1], [0, 0, 1, 1], [], []>} : vector<8x256xbf16>, vector<256x128xbf16>, vector<8x128xf32> -> vector<8x128xf32>
    %20 = vector.broadcast %2 : vector<1x128xf32> to vector<8x128xf32>
    %21 = arith.addf %19, %20 : vector<8x128xf32>
    %22 = arith.truncf %21 : vector<8x128xf32> to vector<8x128xbf16>
    %c0_15 = arith.constant 0 : index
    %c0_16 = arith.constant 0 : index
    %23 = vector.load %arg6[%c0_15, %c0_16] : memref<8x128xbf16, #tpu.memory_space<vmem>>, vector<8x128xbf16>
    tpu.vector_store %arg6[%c0_15, %c0_16], %22 {strides = array<i32>} : memref<8x128xbf16, #tpu.memory_space<vmem>>, vector<8x128xbf16>,
    return
  }
  func.func @transform_0(%arg0: i32) -> (i32, i32) {
    %c0_i32 = arith.constant 0 : i32
    %c0_i32_0 = arith.constant 0 : i32
    return %arg0, %c0_i32 : i32, i32
  }
  func.func @transform_1(%arg0: i32) -> (i32, i32) {
    %c0_i32 = arith.constant 0 : i32
    %c0_i32_0 = arith.constant 0 : i32
    %c0_i32_1 = arith.constant 0 : i32
    return %c0_i32, %c0_i32_0 : i32, i32
  }
  func.func @transform_2(%arg0: i32) -> (i32, i32) {
    %c0_i32 = arith.constant 0 : i32
    %c0_i32_0 = arith.constant 0 : i32
    %c0_i32_1 = arith.constant 0 : i32
    return %c0_i32, %c0_i32_0 : i32, i32
  }
  func.func @transform_3(%arg0: i32) -> (i32, i32) {
    %c0_i32 = arith.constant 0 : i32
    %c0_i32_0 = arith.constant 0 : i32
    %c0_i32_1 = arith.constant 0 : i32
    return %c0_i32, %c0_i32_0 : i32, i32
  }
  func.func @transform_4(%arg0: i32) -> (i32, i32) {
    %c0_i32 = arith.constant 0 : i32
    %c0_i32_0 = arith.constant 0 : i32
    %c0_i32_1 = arith.constant 0 : i32
    return %c0_i32, %c0_i32_0 : i32, i32
  }
  func.func @transform_5(%arg0: i32) -> (i32, i32) {
    %c0_i32 = arith.constant 0 : i32
    %c0_i32_0 = arith.constant 0 : i32
    return %arg0, %c0_i32 : i32, i32
  }
}

</mosaic_0001>

<llo_original>
// kernel: tpu_custom_call.1
$region0: #{tpu_custom_call.1}
  #allocation0 [shape = 'u32[]', space=smem, size = 0x4, offset = 0x4, fixed_abs, tag = 'smem constant byte address 0x4 - core index']
  #allocation1 [shape = 'u32[144,128]{1,0:T(1,128)}', space=vmem, size = 0x12000, scoped, tag = 'internal scratch']
  %s0 = inlined_call_operand.hbm [shape: bf16[8,128], index: 0, kind: input, shape index: {}]
  %s1 = inlined_call_operand.hbm [shape: bf16[128,256], index: 1, kind: input, shape index: {}]
  %s2 = inlined_call_operand.hbm [shape: bf16[256,256], index: 2, kind: input, shape index: {}]
  %s3 = inlined_call_operand.hbm [shape: bf16[256,128], index: 3, kind: input, shape index: {}]
  %s4 = inlined_call_operand.vmem [shape: f32[1,640], index: 4, kind: input, shape index: {}]
  %s5 = inlined_call_operand.hbm [shape: bf16[8,128], index: 5, kind: output, shape index: {}]
  %s6 = sld [smem:[#allocation0]]
  $region46: #{tpu_custom_call.1} parent=0
    _
  %s8 = ssub.s32 1, %s6
  %s9 = scalar_select 0, %s8, %s6
  $region1: #{tpu_custom_call.1} parent=0
    #allocation2 [shape = 'u8[2048]{0}', space=vmem, size = 0x800, scoped, tag = 'input window, operand 0, single buffered']
    #allocation3 [shape = 's32[1]{0}', space=sflag, size = 0x4, scoped, tag = 'scoped memory for tpu_custom_call.1']
    #allocation4 [shape = 's32[1]{0}', space=sflag, size = 0x4, scoped, tag = 'scoped memory for tpu_custom_call.1']
    #allocation5 [shape = 'u8[65536]{0}', space=vmem, size = 0x10000, scoped, tag = 'input window, operand 1, single buffered']
    #allocation6 [shape = 's32[1]{0}', space=sflag, size = 0x4, scoped, tag = 'scoped memory for tpu_custom_call.1']
    #allocation7 [shape = 'u8[131072]{0}', space=vmem, size = 0x20000, scoped, tag = 'input window, operand 2, single buffered']
    #allocation8 [shape = 'u8[65536]{0}', space=vmem, size = 0x10000, scoped, tag = 'input window, operand 3, single buffered']
    #allocation9 [shape = 's32[1]{0}', space=sflag, size = 0x4, scoped, tag = 'scoped memory for tpu_custom_call.1']
    #allocation10 [shape = 'u8[2048]{0}', space=vmem, size = 0x800, scoped, tag = 'output window, operand 0, single buffered']
    %10 = vsyncpa [#allocation3], 0
    %11 = vsyncpa [#allocation6], 0
    %12 = vsyncpa [#allocation9], 0
    %13 = vsyncpa [#allocation4], 0
    // Predicated region
    $region2: #{tpu_custom_call.1} parent=1 // pred_check
      _
    $region3: #{tpu_custom_call.1} parent=1 // pred_check_branch
      %15 = sbr.rel (0) target = $region5
    $region4: #{tpu_custom_call.1} parent=1 // pred_region
      %s17 = ssub.s32 64, 64
      %18 = vsyncadd [#allocation3], %s17
      %s20 = sshll.u32 [#allocation2], 4
      %s21 = int_to_ptr.vmem [resolvable:$true] %s20
      %23 = dma.hbm_to_vmem [thread:$0]  %s0, 64, %s21, [#allocation3]
    $region5: #{tpu_custom_call.1} parent=1 // pred_fallthru
      _
    // Predicated region
    $region6: #{tpu_custom_call.1} parent=1 // pred_check
      _
    $region7: #{tpu_custom_call.1} parent=1 // pred_check_branch
      %25 = sbr.rel (0) target = $region9
    $region8: #{tpu_custom_call.1} parent=1 // pred_region
      %s27 = ssub.s32 2048, 2048
      %28 = vsyncadd [#allocation6], %s27
      %s29 = sshll.u32 [#allocation5], 4
      %s30 = int_to_ptr.vmem [resolvable:$true] %s29
      %35 = dma.hbm_to_vmem [thread:$0]  %s1, 2048, %s30, [#allocation6], 128, 128, 8
    $region9: #{tpu_custom_call.1} parent=1 // pred_fallthru
      _
    // Predicated region
    $region10: #{tpu_custom_call.1} parent=1 // pred_check
      _
    $region11: #{tpu_custom_call.1} parent=1 // pred_check_branch
      %37 = sbr.rel (0) target = $region13
    $region12: #{tpu_custom_call.1} parent=1 // pred_region
      %s39 = ssub.s32 4096, 4096
      %40 = vsyncadd [#allocation6], %s39
      %s41 = sshll.u32 [#allocation7], 4
      %s42 = int_to_ptr.vmem [resolvable:$true] %s41
      %47 = dma.hbm_to_vmem [thread:$0]  %s2, 4096, %s42, [#allocation6], 128, 128, 8
    $region13: #{tpu_custom_call.1} parent=1 // pred_fallthru
      _
    // Predicated region
    $region14: #{tpu_custom_call.1} parent=1 // pred_check
      _
    $region15: #{tpu_custom_call.1} parent=1 // pred_check_branch
      %49 = sbr.rel (0) target = $region17
    $region16: #{tpu_custom_call.1} parent=1 // pred_region
      %s51 = ssub.s32 2048, 2048
      %52 = vsyncadd [#allocation9], %s51
      %s53 = sshll.u32 [#allocation8], 4
      %s54 = int_to_ptr.vmem [resolvable:$true] %s53
      %59 = dma.hbm_to_vmem [thread:$0]  %s3, 2048, %s54, [#allocation9], 64, 64, 4
    $region17: #{tpu_custom_call.1} parent=1 // pred_fallthru
      _
    // Predicated region
    $region18: #{tpu_custom_call.1} parent=1 // pred_check
      _
    $region19: #{tpu_custom_call.1} parent=1 // pred_check_branch
      %61 = sbr.rel (0) target = $region21
    $region20: #{tpu_custom_call.1} parent=1 // pred_region
      _
    $region21: #{tpu_custom_call.1} parent=1 // pred_fallthru
      _
    // Predicated region
    $region22: #{tpu_custom_call.1} parent=1 // pred_check
      _
    $region23: #{tpu_custom_call.1} parent=1 // pred_check_branch
      %63 = sbr.rel (0) target = $region25
    $region24: #{tpu_custom_call.1} parent=1 // pred_region
      %64 = dma.done [#allocation3], 64
    $region25: #{tpu_custom_call.1} parent=1 // pred_fallthru
      _
    // Predicated region
    $region26: #{tpu_custom_call.1} parent=1 // pred_check
      _
    $region27: #{tpu_custom_call.1} parent=1 // pred_check_branch
      %66 = sbr.rel (0) target = $region29
    $region28: #{tpu_custom_call.1} parent=1 // pred_region
      %67 = dma.done [#allocation6], 2048
    $region29: #{tpu_custom_call.1} parent=1 // pred_fallthru
      _
    // Predicated region
    $region30: #{tpu_custom_call.1} parent=1 // pred_check
      _
    $region31: #{tpu_custom_call.1} parent=1 // pred_check_branch
      %69 = sbr.rel (0) target = $region33
    $region32: #{tpu_custom_call.1} parent=1 // pred_region
      %70 = dma.done [#allocation6], 4096
    $region33: #{tpu_custom_call.1} parent=1 // pred_fallthru
      _
    // Predicated region
    $region34: #{tpu_custom_call.1} parent=1 // pred_check
      _
    $region35: #{tpu_custom_call.1} parent=1 // pred_check_branch
      %72 = sbr.rel (0) target = $region37
    $region36: #{tpu_custom_call.1} parent=1 // pred_region
      %73 = dma.done [#allocation9], 2048
    $region37: #{tpu_custom_call.1} parent=1 // pred_fallthru
      _
    %v75 = vld [vmem:[%s4] sm:$0x3]
    %v76 = vld [vmem:[%s4 + $0x2] sm:$0x3]
    %v77 = vld [vmem:[%s4 + $0x4] sm:$0x1]
    %v78 = vld [vmem:[#allocation2] sm:$0xf]
    %v79 = vld [vmem:[#allocation5] sm:$0xff]
    %v80 = vld [vmem:[#allocation5 + $0x8] sm:$0xff]
    %v81 = vld [vmem:[#allocation5 + $0x10] sm:$0xff]
    %v82 = vld [vmem:[#allocation5 + $0x18] sm:$0xff]
    %v83 = vld [vmem:[#allocation5 + $0x20] sm:$0xff]
    %v84 = vld [vmem:[#allocation5 + $0x28] sm:$0xff]
    %v85 = vld [vmem:[#allocation5 + $0x30] sm:$0xff]
    %v86 = vld [vmem:[#allocation5 + $0x38] sm:$0xff]
    %v87 = vld [vmem:[#allocation5 + $0x40] sm:$0xff]
    %v88 = vld [vmem:[#allocation5 + $0x48] sm:$0xff]
    %v89 = vld [vmem:[#allocation5 + $0x50] sm:$0xff]
    %v90 = vld [vmem:[#allocation5 + $0x58] sm:$0xff]
    %v91 = vld [vmem:[#allocation5 + $0x60] sm:$0xff]
    %v92 = vld [vmem:[#allocation5 + $0x68] sm:$0xff]
    %v93 = vld [vmem:[#allocation5 + $0x70] sm:$0xff]
    %v94 = vld [vmem:[#allocation5 + $0x78] sm:$0xff]
    %v96 = vlaneseq
    %v97 = vshrl.u32 %v96, 7
    %v98 = vsub.s32 0, %v97
    %v99 = vrot.slane %v75, %v98
    %v100 = vlaneseq
    %v101 = vshrl.u32 %v100, 7
    %v102 = vsub.s32 1, %v101
    %v103 = vrot.slane %v75, %v102
    %v122 = vunpack.c.l.b16 %v79
    %v123 = vunpack.c.h.b16 %v79
    %v124 = vunpack.c.l.b16 %v80
    %v125 = vunpack.c.h.b16 %v80
    %v126 = vunpack.c.l.b16 %v81
    %v127 = vunpack.c.h.b16 %v81
    %v128 = vunpack.c.l.b16 %v82
    %v129 = vunpack.c.h.b16 %v82
    %v130 = vunpack.c.l.b16 %v83
    %v131 = vunpack.c.h.b16 %v83
    %v132 = vunpack.c.l.b16 %v84
    %v133 = vunpack.c.h.b16 %v84
    %v134 = vunpack.c.l.b16 %v85
    %v135 = vunpack.c.h.b16 %v85
    %v136 = vunpack.c.l.b16 %v86
    %v137 = vunpack.c.h.b16 %v86
    %v138 = vunpack.c.l.b16 %v87
    %v139 = vunpack.c.h.b16 %v87
    %v140 = vunpack.c.l.b16 %v88
    %v141 = vunpack.c.h.b16 %v88
    %v142 = vunpack.c.l.b16 %v89
    %v143 = vunpack.c.h.b16 %v89
    %v144 = vunpack.c.l.b16 %v90
    %v145 = vunpack.c.h.b16 %v90
    %v146 = vunpack.c.l.b16 %v91
    %v147 = vunpack.c.h.b16 %v91
    %v148 = vunpack.c.l.b16 %v92
    %v149 = vunpack.c.h.b16 %v92
    %v150 = vunpack.c.l.b16 %v93
    %v151 = vunpack.c.h.b16 %v93
    %v152 = vunpack.c.l.b16 %v94
    %v153 = vunpack.c.h.b16 %v94
    %v154 = vpack.c.b16 %v124, %v122
    %v155 = vpack.c.b16 %v125, %v123
    %v156 = vpack.c.b16 %v128, %v126
    %v157 = vpack.c.b16 %v129, %v127
    %v158 = vpack.c.b16 %v132, %v130
    %v159 = vpack.c.b16 %v133, %v131
    %v160 = vpack.c.b16 %v136, %v134
    %v161 = vpack.c.b16 %v137, %v135
    %v162 = vpack.c.b16 %v140, %v138
    %v163 = vpack.c.b16 %v141, %v139
    %v164 = vpack.c.b16 %v144, %v142
    %v165 = vpack.c.b16 %v145, %v143
    %v166 = vpack.c.b16 %v148, %v146
    %v167 = vpack.c.b16 %v149, %v147
    %v168 = vpack.c.b16 %v152, %v150
    %v169 = vpack.c.b16 %v153, %v151
    %186 = vmatprep.subr.bf16.mxu0 %v155
    %187 = vmatpush1.bf16.msra.mxu0 %v154
    %188 = vmatprep.subr.bf16.mxu0 %v157
    %189 = vmatpush1.bf16.msra.mxu0 %v156
    %190 = vmatprep.subr.bf16.mxu0 %v159
    %191 = vmatpush1.bf16.msra.mxu0 %v158
    %192 = vmatprep.subr.bf16.mxu0 %v161
    %193 = vmatpush1.bf16.msra.mxu0 %v160
    %194 = vmatprep.subr.bf16.mxu0 %v163
    %195 = vmatpush1.bf16.msra.mxu0 %v162
    %196 = vmatprep.subr.bf16.mxu0 %v165
    %197 = vmatpush1.bf16.msra.mxu0 %v164
    %198 = vmatprep.subr.bf16.mxu0 %v167
    %199 = vmatpush1.bf16.msra.mxu0 %v166
    %200 = vmatprep.subr.bf16.mxu0 %v169
    %201 = vmatpush1.bf16.msra.mxu0 %v168
    %202 = vmatprep.subr.bf16.mxu0 0
    %203 = vmatpush1.bf16.msra.mxu0 0
    %204 = vmatprep.subr.bf16.mxu0 0
    %205 = vmatpush1.bf16.msra.mxu0 0
    %206 = vmatprep.subr.bf16.mxu0 0
    %207 = vmatpush1.bf16.msra.mxu0 0
    %208 = vmatprep.subr.bf16.mxu0 0
    %209 = vmatpush1.bf16.msra.mxu0 0
    %210 = vmatprep.subr.bf16.mxu0 0
    %211 = vmatpush1.bf16.msra.mxu0 0
    %212 = vmatprep.subr.bf16.mxu0 0
    %213 = vmatpush1.bf16.msra.mxu0 0
    %214 = vmatprep.subr.bf16.mxu0 0
    %215 = vmatpush1.bf16.msra.mxu0 0
    %216 = vmatprep.subr.bf16.mxu0 0
    %217 = vmatpush1.bf16.msra.mxu0 0
    %218 = vmatprep.mubr.bf16.mxu0 0
    %219 = vmatmul.mubr.bf16.gmra.mrb[0].mxu0 %v78
    %v220 = vpop.f32.mrb[0].mxu0
    %v221 = vadd.f32 %v99, %v220
    %v222 = vpop.f32.mrb[0].mxu0
    %v223 = vadd.f32 %v103, %v222
    %v224 = vpop.f32.mrb[0].mxu0
    %v225 = vpop.f32.mrb[0].mxu0
    %226 = vdwg.mxu0
    %v227 = vmax.f32 %v221, 0.0
    %v228 = vmax.f32 %v223, 0.0
    %v229 = vpack.c.bf16 %v227, %v227
    %v230 = vpack.c.bf16 %v228, %v228
    %v231 = vld [vmem:[#allocation7] sm:$0xff]
    %v232 = vld [vmem:[#allocation7 + $0x8] sm:$0xff]
    %v233 = vld [vmem:[#allocation7 + $0x10] sm:$0xff]
    %v234 = vld [vmem:[#allocation7 + $0x18] sm:$0xff]
    %v235 = vld [vmem:[#allocation7 + $0x20] sm:$0xff]
    %v236 = vld [vmem:[#allocation7 + $0x28] sm:$0xff]
    %v237 = vld [vmem:[#allocation7 + $0x30] sm:$0xff]
    %v238 = vld [vmem:[#allocation7 + $0x38] sm:$0xff]
    %v239 = vld [vmem:[#allocation7 + $0x40] sm:$0xff]
    %v240 = vld [vmem:[#allocation7 + $0x48] sm:$0xff]
    %v241 = vld [vmem:[#allocation7 + $0x50] sm:$0xff]
    %v242 = vld [vmem:[#allocation7 + $0x58] sm:$0xff]
    %v243 = vld [vmem:[#allocation7 + $0x60] sm:$0xff]
    %v244 = vld [vmem:[#allocation7 + $0x68] sm:$0xff]
    %v245 = vld [vmem:[#allocation7 + $0x70] sm:$0xff]
    %v246 = vld [vmem:[#allocation7 + $0x78] sm:$0xff]
    %v247 = vld [vmem:[#allocation7 + $0x80] sm:$0xff]
    %v248 = vld [vmem:[#allocation7 + $0x88] sm:$0xff]
    %v249 = vld [vmem:[#allocation7 + $0x90] sm:$0xff]
    %v250 = vld [vmem:[#allocation7 + $0x98] sm:$0xff]
    %v251 = vld [vmem:[#allocation7 + $0xa0] sm:$0xff]
    %v252 = vld [vmem:[#allocation7 + $0xa8] sm:$0xff]
    %v253 = vld [vmem:[#allocation7 + $0xb0] sm:$0xff]
    %v254 = vld [vmem:[#allocation7 + $0xb8] sm:$0xff]
    %v255 = vld [vmem:[#allocation7 + $0xc0] sm:$0xff]
    %v256 = vld [vmem:[#allocation7 + $0xc8] sm:$0xff]
    %v257 = vld [vmem:[#allocation7 + $0xd0] sm:$0xff]
    %v258 = vld [vmem:[#allocation7 + $0xd8] sm:$0xff]
    %v259 = vld [vmem:[#allocation7 + $0xe0] sm:$0xff]
    %v260 = vld [vmem:[#allocation7 + $0xe8] sm:$0xff]
    %v261 = vld [vmem:[#allocation7 + $0xf0] sm:$0xff]
    %v262 = vld [vmem:[#allocation7 + $0xf8] sm:$0xff]
    %v264 = vlaneseq
    %v265 = vshrl.u32 %v264, 7
    %v266 = vsub.s32 0, %v265
    %v267 = vrot.slane %v76, %v266
    %v268 = vlaneseq
    %v269 = vshrl.u32 %v268, 7
    %v270 = vsub.s32 1, %v269
    %v271 = vrot.slane %v76, %v270
    %v306 = vunpack.c.l.b16 %v231
    %v307 = vunpack.c.h.b16 %v231
    %v308 = vunpack.c.l.b16 %v232
    %v309 = vunpack.c.h.b16 %v232
    %v310 = vunpack.c.l.b16 %v233
    %v311 = vunpack.c.h.b16 %v233
    %v312 = vunpack.c.l.b16 %v234
    %v313 = vunpack.c.h.b16 %v234
    %v314 = vunpack.c.l.b16 %v235
    %v315 = vunpack.c.h.b16 %v235
    %v316 = vunpack.c.l.b16 %v236
    %v317 = vunpack.c.h.b16 %v236
    %v318 = vunpack.c.l.b16 %v237
    %v319 = vunpack.c.h.b16 %v237
    %v320 = vunpack.c.l.b16 %v238
    %v321 = vunpack.c.h.b16 %v238
    %v322 = vunpack.c.l.b16 %v239
    %v323 = vunpack.c.h.b16 %v239
    %v324 = vunpack.c.l.b16 %v240
    %v325 = vunpack.c.h.b16 %v240
    %v326 = vunpack.c.l.b16 %v241
    %v327 = vunpack.c.h.b16 %v241
    %v328 = vunpack.c.l.b16 %v242
    %v329 = vunpack.c.h.b16 %v242
    %v330 = vunpack.c.l.b16 %v243
    %v331 = vunpack.c.h.b16 %v243
    %v332 = vunpack.c.l.b16 %v244
    %v333 = vunpack.c.h.b16 %v244
    %v334 = vunpack.c.l.b16 %v245
    %v335 = vunpack.c.h.b16 %v245
    %v336 = vunpack.c.l.b16 %v246
    %v337 = vunpack.c.h.b16 %v246
    %v338 = vunpack.c.l.b16 %v247
    %v339 = vunpack.c.h.b16 %v247
    %v340 = vunpack.c.l.b16 %v248
    %v341 = vunpack.c.h.b16 %v248
    %v342 = vunpack.c.l.b16 %v249
    %v343 = vunpack.c.h.b16 %v249
    %v344 = vunpack.c.l.b16 %v250
    %v345 = vunpack.c.h.b16 %v250
    %v346 = vunpack.c.l.b16 %v251
    %v347 = vunpack.c.h.b16 %v251
    %v348 = vunpack.c.l.b16 %v252
    %v349 = vunpack.c.h.b16 %v252
    %v350 = vunpack.c.l.b16 %v253
    %v351 = vunpack.c.h.b16 %v253
    %v352 = vunpack.c.l.b16 %v254
    %v353 = vunpack.c.h.b16 %v254
    %v354 = vunpack.c.l.b16 %v255
    %v355 = vunpack.c.h.b16 %v255
    %v356 = vunpack.c.l.b16 %v256
    %v357 = vunpack.c.h.b16 %v256
    %v358 = vunpack.c.l.b16 %v257
    %v359 = vunpack.c.h.b16 %v257
    %v360 = vunpack.c.l.b16 %v258
    %v361 = vunpack.c.h.b16 %v258
    %v362 = vunpack.c.l.b16 %v259
    %v363 = vunpack.c.h.b16 %v259
    %v364 = vunpack.c.l.b16 %v260
    %v365 = vunpack.c.h.b16 %v260
    %v366 = vunpack.c.l.b16 %v261
    %v367 = vunpack.c.h.b16 %v261
    %v368 = vunpack.c.l.b16 %v262
    %v369 = vunpack.c.h.b16 %v262
    %v370 = vpack.c.b16 %v308, %v306
    %v371 = vpack.c.b16 %v309, %v307
    %v372 = vpack.c.b16 %v312, %v310
    %v373 = vpack.c.b16 %v313, %v311
    %v374 = vpack.c.b16 %v316, %v314
    %v375 = vpack.c.b16 %v317, %v315
    %v376 = vpack.c.b16 %v320, %v318
    %v377 = vpack.c.b16 %v321, %v319
    %v378 = vpack.c.b16 %v324, %v322
    %v379 = vpack.c.b16 %v325, %v323
    %v380 = vpack.c.b16 %v328, %v326
    %v381 = vpack.c.b16 %v329, %v327
    %v382 = vpack.c.b16 %v332, %v330
    %v383 = vpack.c.b16 %v333, %v331
    %v384 = vpack.c.b16 %v336, %v334
    %v385 = vpack.c.b16 %v337, %v335
    %v386 = vpack.c.b16 %v340, %v338
    %v387 = vpack.c.b16 %v341, %v339
    %v388 = vpack.c.b16 %v344, %v342
    %v389 = vpack.c.b16 %v345, %v343
    %v390 = vpack.c.b16 %v348, %v346
    %v391 = vpack.c.b16 %v349, %v347
    %v392 = vpack.c.b16 %v352, %v350
    %v393 = vpack.c.b16 %v353, %v351
    %v394 = vpack.c.b16 %v356, %v354
    %v395 = vpack.c.b16 %v357, %v355
    %v396 = vpack.c.b16 %v360, %v358
    %v397 = vpack.c.b16 %v361, %v359
    %v398 = vpack.c.b16 %v364, %v362
    %v399 = vpack.c.b16 %v365, %v363
    %v400 = vpack.c.b16 %v368, %v366
    %v401 = vpack.c.b16 %v369, %v367
    %434 = vmatprep.subr.bf16.mxu0 %v371
    %435 = vmatpush1.bf16.msra.mxu0 %v370
    %436 = vmatprep.subr.bf16.mxu0 %v373
    %437 = vmatpush1.bf16.msra.mxu0 %v372
    %438 = vmatprep.subr.bf16.mxu0 %v375
    %439 = vmatpush1.bf16.msra.mxu0 %v374
    %440 = vmatprep.subr.bf16.mxu0 %v377
    %441 = vmatpush1.bf16.msra.mxu0 %v376
    %442 = vmatprep.subr.bf16.mxu0 %v379
    %443 = vmatpush1.bf16.msra.mxu0 %v378
    %444 = vmatprep.subr.bf16.mxu0 %v381
    %445 = vmatpush1.bf16.msra.mxu0 %v380
    %446 = vmatprep.subr.bf16.mxu0 %v383
    %447 = vmatpush1.bf16.msra.mxu0 %v382
    %448 = vmatprep.subr.bf16.mxu0 %v385
    %449 = vmatpush1.bf16.msra.mxu0 %v384
    %450 = vmatprep.subr.bf16.mxu0 %v387
    %451 = vmatpush1.bf16.msra.mxu0 %v386
    %452 = vmatprep.subr.bf16.mxu0 %v389
    %453 = vmatpush1.bf16.msra.mxu0 %v388
    %454 = vmatprep.subr.bf16.mxu0 %v391
    %455 = vmatpush1.bf16.msra.mxu0 %v390
    %456 = vmatprep.subr.bf16.mxu0 %v393
    %457 = vmatpush1.bf16.msra.mxu0 %v392
    %458 = vmatprep.subr.bf16.mxu0 %v395
    %459 = vmatpush1.bf16.msra.mxu0 %v394
    %460 = vmatprep.subr.bf16.mxu0 %v397
    %461 = vmatpush1.bf16.msra.mxu0 %v396
    %462 = vmatprep.subr.bf16.mxu0 %v399
    %463 = vmatpush1.bf16.msra.mxu0 %v398
    %464 = vmatprep.subr.bf16.mxu0 %v401
    %465 = vmatpush1.bf16.msra.mxu0 %v400
    %466 = vmatprep.mubr.bf16.mxu0 %v230
    %467 = vmatmul.mubr.bf16.gmra.mrb[0].mxu0 %v229
    %v468 = vpop.f32.mrb[0].mxu0
    %v469 = vadd.f32 %v267, %v468
    %v470 = vpop.f32.mrb[0].mxu0
    %v471 = vadd.f32 %v271, %v470
    %v472 = vpop.f32.mrb[0].mxu0
    %v473 = vpop.f32.mrb[0].mxu0
    %474 = vdwg.mxu0
    %v475 = vmax.f32 %v469, 0.0
    %v476 = vmax.f32 %v471, 0.0
    %v477 = vpack.c.bf16 %v475, %v475
    %v478 = vpack.c.bf16 %v476, %v476
    %v479 = vld [vmem:[#allocation8] sm:$0xf]
    %v480 = vld [vmem:[#allocation8 + $0x4] sm:$0xf]
    %v481 = vld [vmem:[#allocation8 + $0x8] sm:$0xf]
    %v482 = vld [vmem:[#allocation8 + $0xc] sm:$0xf]
    %v483 = vld [vmem:[#allocation8 + $0x10] sm:$0xf]
    %v484 = vld [vmem:[#allocation8 + $0x14] sm:$0xf]
    %v485 = vld [vmem:[#allocation8 + $0x18] sm:$0xf]
    %v486 = vld [vmem:[#allocation8 + $0x1c] sm:$0xf]
    %v487 = vld [vmem:[#allocation8 + $0x20] sm:$0xf]
    %v488 = vld [vmem:[#allocation8 + $0x24] sm:$0xf]
    %v489 = vld [vmem:[#allocation8 + $0x28] sm:$0xf]
    %v490 = vld [vmem:[#allocation8 + $0x2c] sm:$0xf]
    %v491 = vld [vmem:[#allocation8 + $0x30] sm:$0xf]
    %v492 = vld [vmem:[#allocation8 + $0x34] sm:$0xf]
    %v493 = vld [vmem:[#allocation8 + $0x38] sm:$0xf]
    %v494 = vld [vmem:[#allocation8 + $0x3c] sm:$0xf]
    %v495 = vld [vmem:[#allocation8 + $0x40] sm:$0xf]
    %v496 = vld [vmem:[#allocation8 + $0x44] sm:$0xf]
    %v497 = vld [vmem:[#allocation8 + $0x48] sm:$0xf]
    %v498 = vld [vmem:[#allocation8 + $0x4c] sm:$0xf]
    %v499 = vld [vmem:[#allocation8 + $0x50] sm:$0xf]
    %v500 = vld [vmem:[#allocation8 + $0x54] sm:$0xf]
    %v501 = vld [vmem:[#allocation8 + $0x58] sm:$0xf]
    %v502 = vld [vmem:[#allocation8 + $0x5c] sm:$0xf]
    %v503 = vld [vmem:[#allocation8 + $0x60] sm:$0xf]
    %v504 = vld [vmem:[#allocation8 + $0x64] sm:$0xf]
    %v505 = vld [vmem:[#allocation8 + $0x68] sm:$0xf]
    %v506 = vld [vmem:[#allocation8 + $0x6c] sm:$0xf]
    %v507 = vld [vmem:[#allocation8 + $0x70] sm:$0xf]
    %v508 = vld [vmem:[#allocation8 + $0x74] sm:$0xf]
    %v509 = vld [vmem:[#allocation8 + $0x78] sm:$0xf]
    %v510 = vld [vmem:[#allocation8 + $0x7c] sm:$0xf]
    %v512 = vlaneseq
    %v513 = vshrl.u32 %v512, 7
    %v514 = vsub.s32 0, %v513
    %v515 = vrot.slane %v77, %v514
    %v549 = vunpack.c.l.b16 %v479
    %v550 = vunpack.c.l.b16 %v480
    %v551 = vunpack.c.l.b16 %v481
    %v552 = vunpack.c.l.b16 %v482
    %v553 = vunpack.c.l.b16 %v483
    %v554 = vunpack.c.l.b16 %v484
    %v555 = vunpack.c.l.b16 %v485
    %v556 = vunpack.c.l.b16 %v486
    %v557 = vunpack.c.l.b16 %v487
    %v558 = vunpack.c.l.b16 %v488
    %v559 = vunpack.c.l.b16 %v489
    %v560 = vunpack.c.l.b16 %v490
    %v561 = vunpack.c.l.b16 %v491
    %v562 = vunpack.c.l.b16 %v492
    %v563 = vunpack.c.l.b16 %v493
    %v564 = vunpack.c.l.b16 %v494
    %v565 = vunpack.c.l.b16 %v495
    %v566 = vunpack.c.l.b16 %v496
    %v567 = vunpack.c.l.b16 %v497
    %v568 = vunpack.c.l.b16 %v498
    %v569 = vunpack.c.l.b16 %v499
    %v570 = vunpack.c.l.b16 %v500
    %v571 = vunpack.c.l.b16 %v501
    %v572 = vunpack.c.l.b16 %v502
    %v573 = vunpack.c.l.b16 %v503
    %v574 = vunpack.c.l.b16 %v504
    %v575 = vunpack.c.l.b16 %v505
    %v576 = vunpack.c.l.b16 %v506
    %v577 = vunpack.c.l.b16 %v507
    %v578 = vunpack.c.l.b16 %v508
    %v579 = vunpack.c.l.b16 %v509
    %v580 = vunpack.c.l.b16 %v510
    %v581 = vpack.c.b16 %v550, %v549
    %v582 = vpack.c.b16 %v552, %v551
    %v583 = vpack.c.b16 %v554, %v553
    %v584 = vpack.c.b16 %v556, %v555
    %v585 = vpack.c.b16 %v558, %v557
    %v586 = vpack.c.b16 %v560, %v559
    %v587 = vpack.c.b16 %v562, %v561
    %v588 = vpack.c.b16 %v564, %v563
    %v589 = vpack.c.b16 %v566, %v565
    %v590 = vpack.c.b16 %v568, %v567
    %v591 = vpack.c.b16 %v570, %v569
    %v592 = vpack.c.b16 %v572, %v571
    %v593 = vpack.c.b16 %v574, %v573
    %v594 = vpack.c.b16 %v576, %v575
    %v595 = vpack.c.b16 %v578, %v577
    %v596 = vpack.c.b16 %v580, %v579
    %613 = vmatprep.subr.bf16.mxu0 0
    %614 = vmatpush1.bf16.msra.mxu0 %v581
    %615 = vmatprep.subr.bf16.mxu0 0
    %616 = vmatpush1.bf16.msra.mxu0 %v582
    %617 = vmatprep.subr.bf16.mxu0 0
    %618 = vmatpush1.bf16.msra.mxu0 %v583
    %619 = vmatprep.subr.bf16.mxu0 0
    %620 = vmatpush1.bf16.msra.mxu0 %v584
    %621 = vmatprep.subr.bf16.mxu0 0
    %622 = vmatpush1.bf16.msra.mxu0 %v585
    %623 = vmatprep.subr.bf16.mxu0 0
    %624 = vmatpush1.bf16.msra.mxu0 %v586
    %625 = vmatprep.subr.bf16.mxu0 0
    %626 = vmatpush1.bf16.msra.mxu0 %v587
    %627 = vmatprep.subr.bf16.mxu0 0
    %628 = vmatpush1.bf16.msra.mxu0 %v588
    %629 = vmatprep.subr.bf16.mxu0 0
    %630 = vmatpush1.bf16.msra.mxu0 %v589
    %631 = vmatprep.subr.bf16.mxu0 0
    %632 = vmatpush1.bf16.msra.mxu0 %v590
    %633 = vmatprep.subr.bf16.mxu0 0
    %634 = vmatpush1.bf16.msra.mxu0 %v591
    %635 = vmatprep.subr.bf16.mxu0 0
    %636 = vmatpush1.bf16.msra.mxu0 %v592
    %637 = vmatprep.subr.bf16.mxu0 0
    %638 = vmatpush1.bf16.msra.mxu0 %v593
    %639 = vmatprep.subr.bf16.mxu0 0
    %640 = vmatpush1.bf16.msra.mxu0 %v594
    %641 = vmatprep.subr.bf16.mxu0 0
    %642 = vmatpush1.bf16.msra.mxu0 %v595
    %643 = vmatprep.subr.bf16.mxu0 0
    %644 = vmatpush1.bf16.msra.mxu0 %v596
    %645 = vmatprep.mubr.bf16.mxu0 %v478
    %646 = vmatmul.mubr.bf16.gmra.mrb[0].mxu0 %v477
    %v647 = vpop.f32.mrb[0].mxu0
    %v648 = vadd.f32 %v515, %v647
    %v649 = vpop.f32.mrb[0].mxu0
    %v650 = vpop.f32.mrb[0].mxu0
    %v651 = vpop.f32.mrb[0].mxu0
    %652 = vdwg.mxu0
    %v653 = vpack.c.bf16 %v648, %v648
    %654 = vst [vmem:[#allocation10] sm:$0xf] %v653
    // Predicated region
    $region38: #{tpu_custom_call.1} parent=1 // pred_check
      _
    $region39: #{tpu_custom_call.1} parent=1 // pred_check_branch
      %656 = sbr.rel (0) target = $region41
    $region40: #{tpu_custom_call.1} parent=1 // pred_region
      %s658 = ssub.s32 64, 64
      %659 = vsyncadd [#allocation4], %s658
      %s661 = sshll.u32 [#allocation10], 4
      %s662 = int_to_ptr.vmem [resolvable:$true] %s661
      %664 = dma.vmem_to_hbm [thread:$0]  %s662, 64, %s5, [#allocation4]
    $region41: #{tpu_custom_call.1} parent=1 // pred_fallthru
      _
    // Predicated region
    $region42: #{tpu_custom_call.1} parent=1 // pred_check
      _
    $region43: #{tpu_custom_call.1} parent=1 // pred_check_branch
      %666 = sbr.rel (0) target = $region45
    $region44: #{tpu_custom_call.1} parent=1 // pred_region
      %667 = dma.done [#allocation4], 64
    $region45: #{tpu_custom_call.1} parent=1 // pred_fallthru
      _
    %668 = vsyncpa [#allocation3], 1
    %669 = vsyncpa [#allocation6], 1
    %670 = vsyncpa [#allocation9], 1
    %671 = vsyncpa [#allocation4], 1

</llo_original>
